<compile_context>
chip_gen: v7x
topology: tpu7x:2x2x1
jax: 0.10.0
libtpu: 0.0.40
codegen_flags: <defaults>
</compile_context>

<pallas_src>
from functools import partial
from typing import List, Tuple

import jax
import jax.numpy as jnp
from jax.experimental import pallas as pl
from jax.experimental.pallas import tpu as pltpu


_LANE = 128     # lane width: pad all feature dims to a multiple of this
_SUBLANE = 8    # sublane height: pad small batches to a multiple of this


def _round_up(x: int, m: int) -> int:
    return ((x + m - 1) // m) * m


def _vmem_capacity_bytes() -> int:
    """Physical VMEM of the current chip; conservative fallback = v7x (64 MiB/TC)."""
    try:
        return int(pltpu.get_tpu_info().vmem_capacity_bytes)
    except Exception:
        return 64 << 20


def _resident_spec(block_shape) -> pl.BlockSpec:
    """BlockSpec for a block that is identical at every grid step (weights/bias).

    Constant index_map => the block is never re-fetched, so request a single
    pipeline buffer (halves its VMEM share). Falls back to default buffering on
    JAX versions without BlockSpec.pipeline_mode.
    """
    idx = lambda i: (0, 0)
    try:
        return pl.BlockSpec(block_shape, idx, pipeline_mode=pl.Buffered(1))
    except Exception:
        return pl.BlockSpec(block_shape, idx)


# ---------------------------------------------------------------------------
# Fused kernel: (Linear -> ReLU)^(L-1) -> Linear on a single batch tile.
# refs = (x_ref, w0_ref, b0_ref, w1_ref, b1_ref, ..., o_ref)
# ---------------------------------------------------------------------------
def _mlp_fused_kernel(*refs, n_layers: int):
    x_ref = refs[0]
    o_ref = refs[1 + 2 * n_layers]

    h = x_ref[...]                                   # (TM, D0) bf16
    for l in range(n_layers):                        # static unroll (L known at trace time)
        w = refs[1 + 2 * l][...]                     # (Din, Dout) bf16, VMEM-resident
        b = refs[2 + 2 * l][...]                     # (1, Dout) f32
        acc = jnp.dot(h, w, preferred_element_type=jnp.float32)   # MXU, f32 accumulation
        acc = acc + b                                # f32 epilogue: bias broadcast over batch tile
        if l < n_layers - 1:
            h = jnp.maximum(acc, 0.0).astype(jnp.bfloat16)         # ReLU, back to bf16 for next MXU pass
        else:
            o_ref[...] = acc.astype(o_ref.dtype)


# ---------------------------------------------------------------------------
# Parameter init (matches the PyTorch module: xavier_uniform W, bias = 0.01)
# ---------------------------------------------------------------------------
def init_mlp_params(key, n_in: int, hidden_layers: List[int], n_out: int):
    """Returns list of (w (in,out), b (1,out)) f32 at LOGICAL (unpadded) sizes."""
    layers_in = [n_in] + hidden_layers
    layers_out = hidden_layers + [n_out]
    params = []
    for a, b in zip(layers_in, layers_out):
        key, wk = jax.random.split(key)
        bound = (6.0 / (a + b)) ** 0.5               # xavier_uniform, gain=1
        w = jax.random.uniform(wk, (a, b), dtype=jnp.float32, minval=-bound, maxval=bound)
        bias = jnp.full((1, b), 0.01, dtype=jnp.float32)
        params.append((w, bias))
    return params


def pad_params(params) -> List[Tuple[jax.Array, jax.Array]]:
    """Zero-pad feature dims to multiples of 128; weights -> bf16 (MXU-native), bias stays f32."""
    padded = []
    for w, b in params:
        din, dout = w.shape
        din_p, dout_p = _round_up(din, _LANE), _round_up(dout, _LANE)
        w_p = jnp.pad(w, ((0, din_p - din), (0, dout_p - dout))).astype(jnp.bfloat16)
        b_p = jnp.pad(b, ((0, 0), (0, dout_p - dout)))       # f32
        padded.append((w_p, b_p))
    return padded


# ---------------------------------------------------------------------------
# Batch-tile selection: VMEM-aware, and >= 2 grid tiles when B allows (v7x megacore).
# ---------------------------------------------------------------------------
def _choose_tm(B: int, d0: int, d_last: int, d_max: int,
               resident_bytes: int, vmem_cap: int) -> int:
    if B <= 128:
        return _round_up(max(B, 1), _SUBLANE)        # single sublane-aligned tile

    budget = int(vmem_cap * 0.7) - resident_bytes

    def tile_bytes(tm):
        # double-buffered bf16 x tile + double-buffered f32 out tile
        # + headroom for the unrolled f32 intermediates (widest layer).
        return 2 * tm * d0 * 2 + 2 * tm * d_last * 4 + 2 * tm * d_max * 4

    tm = 128
    for cand in (512, 256, 128):
        if _round_up(B, cand) // cand < 2:           # would leave a v7x TensorCore idle
            continue
        if tile_bytes(cand) <= budget:
            tm = cand
            break
    return tm


# ---------------------------------------------------------------------------
# Fused forward pass
# ---------------------------------------------------------------------------
def mlp_forward(x: jax.Array, padded_params, n_out: int) -> jax.Array:
    """x: (B, n_in); padded_params: list of (W (Din_p, Dout_p) bf16, b (1, Dout_p) f32)."""
    B, n_in = x.shape
    n_layers = len(padded_params)
    d0 = padded_params[0][0].shape[0]
    d_last = padded_params[-1][0].shape[1]
    d_max = max(max(w.shape) for w, _ in padded_params)

    resident_bytes = sum(w.size * w.dtype.itemsize + b.size * b.dtype.itemsize
                         for w, b in padded_params)
    vmem_cap = _vmem_capacity_bytes()
    # TODO(synk): if resident weights alone exceed the VMEM budget, tile the widest
    # layer (extra grid axis over Dout / pltpu.emit_pipeline) instead of keeping
    # every weight VMEM-resident.

    tm = _choose_tm(B, d0, d_last, d_max, resident_bytes, vmem_cap)
    b_pad = _round_up(B, tm)

    # Stream activations in bf16 (halves x HBM traffic); pad only when needed
    # (padded lanes stay zero through every layer: padded W rows/cols and bias are zero).
    x_bf = x.astype(jnp.bfloat16)
    if (b_pad, d0) != (B, n_in):
        x_bf = jnp.pad(x_bf, ((0, b_pad - B), (0, d0 - n_in)))

    in_specs = [pl.BlockSpec((tm, d0), lambda i: (i, 0))]
    flat_inputs = [x_bf]
    flops = 0
    bytes_accessed = 2 * b_pad * d0 + 4 * b_pad * d_last
    for w_p, bias_p in padded_params:
        din_p, dout_p = w_p.shape
        in_specs.append(_resident_spec((din_p, dout_p)))     # VMEM-resident, single-buffered
        in_specs.append(_resident_spec((1, dout_p)))
        flat_inputs.extend([w_p, bias_p])
        flops += 2 * b_pad * din_p * dout_p
        bytes_accessed += 2 * din_p * dout_p + 4 * dout_p

    tile_io_bytes = 2 * tm * d0 * 2 + 2 * tm * d_last * 4 + 2 * tm * d_max * 4
    vmem_limit = min(int(vmem_cap * 0.9),
                     max(resident_bytes + tile_io_bytes + (8 << 20), 32 << 20))

    out = pl.pallas_call(
        partial(_mlp_fused_kernel, n_layers=n_layers),
        out_shape=jax.ShapeDtypeStruct((b_pad, d_last), jnp.float32),
        grid=(b_pad // tm,),
        in_specs=in_specs,
        out_specs=pl.BlockSpec((tm, d_last), lambda i: (i, 0)),
        compiler_params=pltpu.CompilerParams(
            dimension_semantics=("parallel",),       # shards batch tiles across TCs on v7x
            vmem_limit_bytes=vmem_limit,
        ),
        cost_estimate=pl.CostEstimate(
            flops=flops, transcendentals=0, bytes_accessed=bytes_accessed
        ),
    )(*flat_inputs)

    if (b_pad, d_last) != (B, n_out):
        out = out[:B, :n_out]
    return out


# ---------------------------------------------------------------------------
# Demo / self-check
# ---------------------------------------------------------------------------
if __name__ == "__main__":
    batch = 8
    n_in = 32
    hidden_layers = [64, 48]
    n_out = 10

    key = jax.random.PRNGKey(0)
    key, xk = jax.random.split(key)
    x = jax.random.normal(xk, (batch, n_in), dtype=jnp.float32)

    params = init_mlp_params(key, n_in, hidden_layers, n_out)   # logical (unpadded) f32
    padded_params = pad_params(params)                          # lane-dense bf16 W, f32 b

    fwd = jax.jit(lambda xx: mlp_forward(xx, padded_params, n_out))
    out = jax.block_until_ready(fwd(x))

    # Pure-JAX f32 reference of the module's math (bf16 MXU inputs => loose tolerance).
    ref = x
    for i, (w, b) in enumerate(params):
        ref = ref @ w + b
        if i < len(params) - 1:
            ref = jnp.maximum(ref, 0.0)

    assert out.shape == (batch, n_out)
    err = float(jnp.max(jnp.abs(out - ref)))
    assert jnp.allclose(out, ref, atol=5e-2, rtol=5e-2), f"max abs err = {err}"

    print("KERNEL_OK")
</pallas_src>

<mosaic_0001>
module attributes {stable_mosaic.version = 11 : i64} {
  func.func @_mlp_fused_kernel(%arg0: i32, %arg1: memref<8x128xbf16, #tpu.memory_space<vmem>>, %arg2: memref<128x128xbf16, #tpu.memory_space<vmem>>, %arg3: memref<1x128xf32, #tpu.memory_space<vmem>>, %arg4: memref<128x128xbf16, #tpu.memory_space<vmem>>, %arg5: memref<1x128xf32, #tpu.memory_space<vmem>>, %arg6: memref<128x128xbf16, #tpu.memory_space<vmem>>, %arg7: memref<1x128xf32, #tpu.memory_space<vmem>>, %arg8: memref<8x128xf32, #tpu.memory_space<vmem>>) attributes {dimension_semantics = [#tpu.dimension_semantics<parallel>], iteration_bounds = array<i64: 1>, scalar_prefetch = 0 : i64, scratch_operands = 0 : i64, tpu.core_type = #tpu.core_type<tc>, window_params = [{transform_indices = @transform_0, window_bounds = array<i64: 8, 128>}, {pipeline_mode = #tpu.pipeline_mode<synchronous>, transform_indices = @transform_1, window_bounds = array<i64: 128, 128>}, {pipeline_mode = #tpu.pipeline_mode<synchronous>, transform_indices = @transform_2, window_bounds = array<i64: 1, 128>}, {pipeline_mode = #tpu.pipeline_mode<synchronous>, transform_indices = @transform_3, window_bounds = array<i64: 128, 128>}, {pipeline_mode = #tpu.pipeline_mode<synchronous>, transform_indices = @transform_4, window_bounds = array<i64: 1, 128>}, {pipeline_mode = #tpu.pipeline_mode<synchronous>, transform_indices = @transform_5, window_bounds = array<i64: 128, 128>}, {pipeline_mode = #tpu.pipeline_mode<synchronous>, transform_indices = @transform_6, window_bounds = array<i64: 1, 128>}, {transform_indices = @transform_7, window_bounds = array<i64: 8, 128>}]} {
    %c0 = arith.constant 0 : index
    %c0_0 = arith.constant 0 : index
    %0 = vector.load %arg1[%c0, %c0_0] : memref<8x128xbf16, #tpu.memory_space<vmem>>, vector<8x128xbf16>
    %c0_1 = arith.constant 0 : index
    %c0_2 = arith.constant 0 : index
    %1 = vector.load %arg2[%c0_1, %c0_2] : memref<128x128xbf16, #tpu.memory_space<vmem>>, vector<128x128xbf16>
    %c0_3 = arith.constant 0 : index
    %c0_4 = arith.constant 0 : index
    %2 = vector.load %arg3[%c0_3, %c0_4] : memref<1x128xf32, #tpu.memory_space<vmem>>, vector<1x128xf32>
    %cst = arith.constant dense<0.000000e+00> : vector<8x128xf32>
    %3 = tpu.matmul %0, %1, %cst {dimension_numbers = #tpu.dot_dimension_numbers<[1], [0], [0], [1], [0, 0, 1, 1], [], []>} : vector<8x128xbf16>, vector<128x128xbf16>, vector<8x128xf32> -> vector<8x128xf32>
    %4 = vector.broadcast %2 : vector<1x128xf32> to vector<8x128xf32>
    %5 = arith.addf %3, %4 : vector<8x128xf32>
    %cst_5 = arith.constant 0.000000e+00 : f32
    %6 = vector.broadcast %cst_5 : f32 to vector<8x128xf32>
    %7 = arith.maximumf %5, %6 : vector<8x128xf32>
    %8 = arith.truncf %7 : vector<8x128xf32> to vector<8x128xbf16>
    %c0_6 = arith.constant 0 : index
    %c0_7 = arith.constant 0 : index
    %9 = vector.load %arg4[%c0_6, %c0_7] : memref<128x128xbf16, #tpu.memory_space<vmem>>, vector<128x128xbf16>
    %c0_8 = arith.constant 0 : index
    %c0_9 = arith.constant 0 : index
    %10 = vector.load %arg5[%c0_8, %c0_9] : memref<1x128xf32, #tpu.memory_space<vmem>>, vector<1x128xf32>
    %cst_10 = arith.constant dense<0.000000e+00> : vector<8x128xf32>
    %11 = tpu.matmul %8, %9, %cst_10 {dimension_numbers = #tpu.dot_dimension_numbers<[1], [0], [0], [1], [0, 0, 1, 1], [], []>} : vector<8x128xbf16>, vector<128x128xbf16>, vector<8x128xf32> -> vector<8x128xf32>
    %12 = vector.broadcast %10 : vector<1x128xf32> to vector<8x128xf32>
    %13 = arith.addf %11, %12 : vector<8x128xf32>
    %cst_11 = arith.constant 0.000000e+00 : f32
    %14 = vector.broadcast %cst_11 : f32 to vector<8x128xf32>
    %15 = arith.maximumf %13, %14 : vector<8x128xf32>
    %16 = arith.truncf %15 : vector<8x128xf32> to vector<8x128xbf16>
    %c0_12 = arith.constant 0 : index
    %c0_13 = arith.constant 0 : index
    %17 = vector.load %arg6[%c0_12, %c0_13] : memref<128x128xbf16, #tpu.memory_space<vmem>>, vector<128x128xbf16>
    %c0_14 = arith.constant 0 : index
    %c0_15 = arith.constant 0 : index
    %18 = vector.load %arg7[%c0_14, %c0_15] : memref<1x128xf32, #tpu.memory_space<vmem>>, vector<1x128xf32>
    %cst_16 = arith.constant dense<0.000000e+00> : vector<8x128xf32>
    %19 = tpu.matmul %16, %17, %cst_16 {dimension_numbers = #tpu.dot_dimension_numbers<[1], [0], [0], [1], [0, 0, 1, 1], [], []>} : vector<8x128xbf16>, vector<128x128xbf16>, vector<8x128xf32> -> vector<8x128xf32>
    %20 = vector.broadcast %18 : vector<1x128xf32> to vector<8x128xf32>
    %21 = arith.addf %19, %20 : vector<8x128xf32>
    %c0_17 = arith.constant 0 : index
    %c0_18 = arith.constant 0 : index
    %22 = vector.load %arg8[%c0_17, %c0_18] : memref<8x128xf32, #tpu.memory_space<vmem>>, vector<8x128xf32>
    tpu.vector_store %arg8[%c0_17, %c0_18], %21 {strides = array<i32>} : memref<8x128xf32, #tpu.memory_space<vmem>>, vector<8x128xf32>,
    return
  }
  func.func @transform_0(%arg0: i32) -> (i32, i32) {
    %c0_i32 = arith.constant 0 : i32
    %c0_i32_0 = arith.constant 0 : i32
    return %arg0, %c0_i32 : i32, i32
  }
  func.func @transform_1(%arg0: i32) -> (i32, i32) {
    %c0_i32 = arith.constant 0 : i32
    %c0_i32_0 = arith.constant 0 : i32
    %c0_i32_1 = arith.constant 0 : i32
    return %c0_i32, %c0_i32_0 : i32, i32
  }
  func.func @transform_2(%arg0: i32) -> (i32, i32) {
    %c0_i32 = arith.constant 0 : i32
    %c0_i32_0 = arith.constant 0 : i32
    %c0_i32_1 = arith.constant 0 : i32
    return %c0_i32, %c0_i32_0 : i32, i32
  }
  func.func @transform_3(%arg0: i32) -> (i32, i32) {
    %c0_i32 = arith.constant 0 : i32
    %c0_i32_0 = arith.constant 0 : i32
    %c0_i32_1 = arith.constant 0 : i32
    return %c0_i32, %c0_i32_0 : i32, i32
  }
  func.func @transform_4(%arg0: i32) -> (i32, i32) {
    %c0_i32 = arith.constant 0 : i32
    %c0_i32_0 = arith.constant 0 : i32
    %c0_i32_1 = arith.constant 0 : i32
    return %c0_i32, %c0_i32_0 : i32, i32
  }
  func.func @transform_5(%arg0: i32) -> (i32, i32) {
    %c0_i32 = arith.constant 0 : i32
    %c0_i32_0 = arith.constant 0 : i32
    %c0_i32_1 = arith.constant 0 : i32
    return %c0_i32, %c0_i32_0 : i32, i32
  }
  func.func @transform_6(%arg0: i32) -> (i32, i32) {
    %c0_i32 = arith.constant 0 : i32
    %c0_i32_0 = arith.constant 0 : i32
    %c0_i32_1 = arith.constant 0 : i32
    return %c0_i32, %c0_i32_0 : i32, i32
  }
  func.func @transform_7(%arg0: i32) -> (i32, i32) {
    %c0_i32 = arith.constant 0 : i32
    %c0_i32_0 = arith.constant 0 : i32
    return %arg0, %c0_i32 : i32, i32
  }
}

</mosaic_0001>

<llo_original>
// kernel: _lambda_.1
$region0: #{_lambda_.1}
  #allocation0 [shape = 'u32[]', space=smem, size = 0x4, offset = 0x4, fixed_abs, tag = 'smem constant byte address 0x4 - core index']
  #allocation1 [shape = 'u32[144,128]{1,0:T(1,128)}', space=vmem, size = 0x12000, scoped, tag = 'internal scratch']
  %s0 = inlined_call_operand.vmem [shape: bf16[8,128], index: 0, kind: input, shape index: {}]
  %s1 = inlined_call_operand.hbm [shape: bf16[128,128], index: 1, kind: input, shape index: {}]
  %s2 = inlined_call_operand.vmem [shape: f32[1,128], index: 2, kind: input, shape index: {}]
  %s3 = inlined_call_operand.hbm [shape: bf16[128,128], index: 3, kind: input, shape index: {}]
  %s4 = inlined_call_operand.vmem [shape: f32[1,128], index: 4, kind: input, shape index: {}]
  %s5 = inlined_call_operand.hbm [shape: bf16[128,128], index: 5, kind: input, shape index: {}]
  %s6 = inlined_call_operand.vmem [shape: f32[1,128], index: 6, kind: input, shape index: {}]
  %s7 = inlined_call_operand.hbm [shape: f32[8,128], index: 7, kind: output, shape index: {}]
  %s8 = sld [smem:[#allocation0]]
  $region50: #{_lambda_.1} parent=0
    _
  %s10 = ssub.s32 1, %s8
  %s11 = scalar_select 0, %s10, %s8
  $region1: #{_lambda_.1} parent=0
    #allocation2 [shape = 'u8[32768]{0}', space=vmem, size = 0x8000, scoped, tag = 'input window, operand 1, single buffered']
    #allocation3 [shape = 's32[1]{0}', space=sflag, size = 0x4, scoped, tag = 'scoped memory for _lambda_.1']
    #allocation4 [shape = 's32[1]{0}', space=sflag, size = 0x4, scoped, tag = 'scoped memory for _lambda_.1']
    #allocation5 [shape = 'u8[32768]{0}', space=vmem, size = 0x8000, scoped, tag = 'input window, operand 3, single buffered']
    #allocation6 [shape = 's32[1]{0}', space=sflag, size = 0x4, scoped, tag = 'scoped memory for _lambda_.1']
    #allocation7 [shape = 'u8[32768]{0}', space=vmem, size = 0x8000, scoped, tag = 'input window, operand 5, single buffered']
    #allocation8 [shape = 'u8[4096]{0}', space=vmem, size = 0x1000, scoped, tag = 'output window, operand 0, single buffered']
    %12 = vsyncpa [#allocation3], 0
    %13 = vsyncpa [#allocation6], 0
    %14 = vsyncpa [#allocation4], 0
    // Predicated region
    $region2: #{_lambda_.1} parent=1 // pred_check
      _
    $region3: #{_lambda_.1} parent=1 // pred_check_branch
      %16 = sbr.rel (0) target = $region5
    $region4: #{_lambda_.1} parent=1 // pred_region
      _
    $region5: #{_lambda_.1} parent=1 // pred_fallthru
      _
    // Predicated region
    $region6: #{_lambda_.1} parent=1 // pred_check
      _
    $region7: #{_lambda_.1} parent=1 // pred_check_branch
      %18 = sbr.rel (0) target = $region9
    $region8: #{_lambda_.1} parent=1 // pred_region
      %s20 = ssub.s32 1024, 1024
      %21 = vsyncadd [#allocation3], %s20
      %s22 = sshll.u32 [#allocation2], 4
      %s23 = int_to_ptr.vmem [resolvable:$true] %s22
      %28 = dma.hbm_to_vmem [thread:$0]  %s1, 1024, %s23, [#allocation3], 64, 64, 4
    $region9: #{_lambda_.1} parent=1 // pred_fallthru
      _
    // Predicated region
    $region10: #{_lambda_.1} parent=1 // pred_check
      _
    $region11: #{_lambda_.1} parent=1 // pred_check_branch
      %30 = sbr.rel (0) target = $region13
    $region12: #{_lambda_.1} parent=1 // pred_region
      _
    $region13: #{_lambda_.1} parent=1 // pred_fallthru
      _
    // Predicated region
    $region14: #{_lambda_.1} parent=1 // pred_check
      _
    $region15: #{_lambda_.1} parent=1 // pred_check_branch
      %32 = sbr.rel (0) target = $region17
    $region16: #{_lambda_.1} parent=1 // pred_region
      %s34 = ssub.s32 1024, 1024
      %35 = vsyncadd [#allocation6], %s34
      %s36 = sshll.u32 [#allocation5], 4
      %s37 = int_to_ptr.vmem [resolvable:$true] %s36
      %42 = dma.hbm_to_vmem [thread:$0]  %s3, 1024, %s37, [#allocation6], 64, 64, 4
    $region17: #{_lambda_.1} parent=1 // pred_fallthru
      _
    // Predicated region
    $region18: #{_lambda_.1} parent=1 // pred_check
      _
    $region19: #{_lambda_.1} parent=1 // pred_check_branch
      %44 = sbr.rel (0) target = $region21
    $region20: #{_lambda_.1} parent=1 // pred_region
      _
    $region21: #{_lambda_.1} parent=1 // pred_fallthru
      _
    // Predicated region
    $region22: #{_lambda_.1} parent=1 // pred_check
      _
    $region23: #{_lambda_.1} parent=1 // pred_check_branch
      %46 = sbr.rel (0) target = $region25
    $region24: #{_lambda_.1} parent=1 // pred_region
      %s48 = ssub.s32 1024, 1024
      %49 = vsyncadd [#allocation6], %s48
      %s50 = sshll.u32 [#allocation7], 4
      %s51 = int_to_ptr.vmem [resolvable:$true] %s50
      %56 = dma.hbm_to_vmem [thread:$0]  %s5, 1024, %s51, [#allocation6], 64, 64, 4
    $region25: #{_lambda_.1} parent=1 // pred_fallthru
      _
    // Predicated region
    $region26: #{_lambda_.1} parent=1 // pred_check
      _
    $region27: #{_lambda_.1} parent=1 // pred_check_branch
      %58 = sbr.rel (0) target = $region29
    $region28: #{_lambda_.1} parent=1 // pred_region
      _
    $region29: #{_lambda_.1} parent=1 // pred_fallthru
      _
    // Predicated region
    $region30: #{_lambda_.1} parent=1 // pred_check
      _
    $region31: #{_lambda_.1} parent=1 // pred_check_branch
      %60 = sbr.rel (0) target = $region33
    $region32: #{_lambda_.1} parent=1 // pred_region
      %61 = dma.done [#allocation3], 1024
    $region33: #{_lambda_.1} parent=1 // pred_fallthru
      _
    // Predicated region
    $region34: #{_lambda_.1} parent=1 // pred_check
      _
    $region35: #{_lambda_.1} parent=1 // pred_check_branch
      %63 = sbr.rel (0) target = $region37
    $region36: #{_lambda_.1} parent=1 // pred_region
      %64 = dma.done [#allocation6], 1024
    $region37: #{_lambda_.1} parent=1 // pred_fallthru
      _
    // Predicated region
    $region38: #{_lambda_.1} parent=1 // pred_check
      _
    $region39: #{_lambda_.1} parent=1 // pred_check_branch
      %66 = sbr.rel (0) target = $region41
    $region40: #{_lambda_.1} parent=1 // pred_region
      %67 = dma.done [#allocation6], 1024
    $region41: #{_lambda_.1} parent=1 // pred_fallthru
      _
    %v69 = vld [vmem:[%s0] sm:$0xf]
    %v70 = vld [vmem:[#allocation2] sm:$0xf]
    %v71 = vld [vmem:[#allocation2 + $0x4] sm:$0xf]
    %v72 = vld [vmem:[#allocation2 + $0x8] sm:$0xf]
    %v73 = vld [vmem:[#allocation2 + $0xc] sm:$0xf]
    %v74 = vld [vmem:[#allocation2 + $0x10] sm:$0xf]
    %v75 = vld [vmem:[#allocation2 + $0x14] sm:$0xf]
    %v76 = vld [vmem:[#allocation2 + $0x18] sm:$0xf]
    %v77 = vld [vmem:[#allocation2 + $0x1c] sm:$0xf]
    %v78 = vld [vmem:[#allocation2 + $0x20] sm:$0xf]
    %v79 = vld [vmem:[#allocation2 + $0x24] sm:$0xf]
    %v80 = vld [vmem:[#allocation2 + $0x28] sm:$0xf]
    %v81 = vld [vmem:[#allocation2 + $0x2c] sm:$0xf]
    %v82 = vld [vmem:[#allocation2 + $0x30] sm:$0xf]
    %v83 = vld [vmem:[#allocation2 + $0x34] sm:$0xf]
    %v84 = vld [vmem:[#allocation2 + $0x38] sm:$0xf]
    %v85 = vld [vmem:[#allocation2 + $0x3c] sm:$0xf]
    %v86 = vld [vmem:[%s2] sm:$0x1]
    %v88 = vlaneseq
    %v89 = vshrl.u32 %v88, 7
    %v90 = vsub.s32 0, %v89
    %v91 = vrot.slane %v86, %v90
    %v109 = vunpack.c.l.b16 %v70
    %v110 = vunpack.c.l.b16 %v71
    %v111 = vunpack.c.l.b16 %v72
    %v112 = vunpack.c.l.b16 %v73
    %v113 = vunpack.c.l.b16 %v74
    %v114 = vunpack.c.l.b16 %v75
    %v115 = vunpack.c.l.b16 %v76
    %v116 = vunpack.c.l.b16 %v77
    %v117 = vunpack.c.l.b16 %v78
    %v118 = vunpack.c.l.b16 %v79
    %v119 = vunpack.c.l.b16 %v80
    %v120 = vunpack.c.l.b16 %v81
    %v121 = vunpack.c.l.b16 %v82
    %v122 = vunpack.c.l.b16 %v83
    %v123 = vunpack.c.l.b16 %v84
    %v124 = vunpack.c.l.b16 %v85
    %v125 = vpack.c.b16 %v110, %v109
    %v126 = vpack.c.b16 %v112, %v111
    %v127 = vpack.c.b16 %v114, %v113
    %v128 = vpack.c.b16 %v116, %v115
    %v129 = vpack.c.b16 %v118, %v117
    %v130 = vpack.c.b16 %v120, %v119
    %v131 = vpack.c.b16 %v122, %v121
    %v132 = vpack.c.b16 %v124, %v123
    %141 = vmatprep.subr.bf16.mxu0 0
    %142 = vmatpush1.bf16.msra.mxu0 %v125
    %143 = vmatprep.subr.bf16.mxu0 0
    %144 = vmatpush1.bf16.msra.mxu0 %v126
    %145 = vmatprep.subr.bf16.mxu0 0
    %146 = vmatpush1.bf16.msra.mxu0 %v127
    %147 = vmatprep.subr.bf16.mxu0 0
    %148 = vmatpush1.bf16.msra.mxu0 %v128
    %149 = vmatprep.subr.bf16.mxu0 0
    %150 = vmatpush1.bf16.msra.mxu0 %v129
    %151 = vmatprep.subr.bf16.mxu0 0
    %152 = vmatpush1.bf16.msra.mxu0 %v130
    %153 = vmatprep.subr.bf16.mxu0 0
    %154 = vmatpush1.bf16.msra.mxu0 %v131
    %155 = vmatprep.subr.bf16.mxu0 0
    %156 = vmatpush1.bf16.msra.mxu0 %v132
    %157 = vmatprep.subr.bf16.mxu0 0
    %158 = vmatpush1.bf16.msra.mxu0 0
    %159 = vmatprep.subr.bf16.mxu0 0
    %160 = vmatpush1.bf16.msra.mxu0 0
    %161 = vmatprep.subr.bf16.mxu0 0
    %162 = vmatpush1.bf16.msra.mxu0 0
    %163 = vmatprep.subr.bf16.mxu0 0
    %164 = vmatpush1.bf16.msra.mxu0 0
    %165 = vmatprep.subr.bf16.mxu0 0
    %166 = vmatpush1.bf16.msra.mxu0 0
    %167 = vmatprep.subr.bf16.mxu0 0
    %168 = vmatpush1.bf16.msra.mxu0 0
    %169 = vmatprep.subr.bf16.mxu0 0
    %170 = vmatpush1.bf16.msra.mxu0 0
    %171 = vmatprep.subr.bf16.mxu0 0
    %172 = vmatpush1.bf16.msra.mxu0 0
    %173 = vmatprep.mubr.bf16.mxu0 0
    %174 = vmatmul.mubr.bf16.gmra.mrb[0].mxu0 %v69
    %v175 = vpop.f32.mrb[0].mxu0
    %v176 = vadd.f32 %v91, %v175
    %v177 = vpop.f32.mrb[0].mxu0
    %v178 = vpop.f32.mrb[0].mxu0
    %v179 = vpop.f32.mrb[0].mxu0
    %180 = vdwg.mxu0
    %v181 = vmax.f32 %v176, 0.0
    %v182 = vpack.c.bf16 %v181, %v181
    %v183 = vld [vmem:[#allocation5] sm:$0xf]
    %v184 = vld [vmem:[#allocation5 + $0x4] sm:$0xf]
    %v185 = vld [vmem:[#allocation5 + $0x8] sm:$0xf]
    %v186 = vld [vmem:[#allocation5 + $0xc] sm:$0xf]
    %v187 = vld [vmem:[#allocation5 + $0x10] sm:$0xf]
    %v188 = vld [vmem:[#allocation5 + $0x14] sm:$0xf]
    %v189 = vld [vmem:[#allocation5 + $0x18] sm:$0xf]
    %v190 = vld [vmem:[#allocation5 + $0x1c] sm:$0xf]
    %v191 = vld [vmem:[#allocation5 + $0x20] sm:$0xf]
    %v192 = vld [vmem:[#allocation5 + $0x24] sm:$0xf]
    %v193 = vld [vmem:[#allocation5 + $0x28] sm:$0xf]
    %v194 = vld [vmem:[#allocation5 + $0x2c] sm:$0xf]
    %v195 = vld [vmem:[#allocation5 + $0x30] sm:$0xf]
    %v196 = vld [vmem:[#allocation5 + $0x34] sm:$0xf]
    %v197 = vld [vmem:[#allocation5 + $0x38] sm:$0xf]
    %v198 = vld [vmem:[#allocation5 + $0x3c] sm:$0xf]
    %v199 = vld [vmem:[%s4] sm:$0x1]
    %v201 = vlaneseq
    %v202 = vshrl.u32 %v201, 7
    %v203 = vsub.s32 0, %v202
    %v204 = vrot.slane %v199, %v203
    %v222 = vunpack.c.l.b16 %v183
    %v223 = vunpack.c.l.b16 %v184
    %v224 = vunpack.c.l.b16 %v185
    %v225 = vunpack.c.l.b16 %v186
    %v226 = vunpack.c.l.b16 %v187
    %v227 = vunpack.c.l.b16 %v188
    %v228 = vunpack.c.l.b16 %v189
    %v229 = vunpack.c.l.b16 %v190
    %v230 = vunpack.c.l.b16 %v191
    %v231 = vunpack.c.l.b16 %v192
    %v232 = vunpack.c.l.b16 %v193
    %v233 = vunpack.c.l.b16 %v194
    %v234 = vunpack.c.l.b16 %v195
    %v235 = vunpack.c.l.b16 %v196
    %v236 = vunpack.c.l.b16 %v197
    %v237 = vunpack.c.l.b16 %v198
    %v238 = vpack.c.b16 %v223, %v222
    %v239 = vpack.c.b16 %v225, %v224
    %v240 = vpack.c.b16 %v227, %v226
    %v241 = vpack.c.b16 %v229, %v228
    %v242 = vpack.c.b16 %v231, %v230
    %v243 = vpack.c.b16 %v233, %v232
    %v244 = vpack.c.b16 %v235, %v234
    %v245 = vpack.c.b16 %v237, %v236
    %254 = vmatprep.subr.bf16.mxu0 0
    %255 = vmatpush1.bf16.msra.mxu0 %v238
    %256 = vmatprep.subr.bf16.mxu0 0
    %257 = vmatpush1.bf16.msra.mxu0 %v239
    %258 = vmatprep.subr.bf16.mxu0 0
    %259 = vmatpush1.bf16.msra.mxu0 %v240
    %260 = vmatprep.subr.bf16.mxu0 0
    %261 = vmatpush1.bf16.msra.mxu0 %v241
    %262 = vmatprep.subr.bf16.mxu0 0
    %263 = vmatpush1.bf16.msra.mxu0 %v242
    %264 = vmatprep.subr.bf16.mxu0 0
    %265 = vmatpush1.bf16.msra.mxu0 %v243
    %266 = vmatprep.subr.bf16.mxu0 0
    %267 = vmatpush1.bf16.msra.mxu0 %v244
    %268 = vmatprep.subr.bf16.mxu0 0
    %269 = vmatpush1.bf16.msra.mxu0 %v245
    %270 = vmatprep.subr.bf16.mxu0 0
    %271 = vmatpush1.bf16.msra.mxu0 0
    %272 = vmatprep.subr.bf16.mxu0 0
    %273 = vmatpush1.bf16.msra.mxu0 0
    %274 = vmatprep.subr.bf16.mxu0 0
    %275 = vmatpush1.bf16.msra.mxu0 0
    %276 = vmatprep.subr.bf16.mxu0 0
    %277 = vmatpush1.bf16.msra.mxu0 0
    %278 = vmatprep.subr.bf16.mxu0 0
    %279 = vmatpush1.bf16.msra.mxu0 0
    %280 = vmatprep.subr.bf16.mxu0 0
    %281 = vmatpush1.bf16.msra.mxu0 0
    %282 = vmatprep.subr.bf16.mxu0 0
    %283 = vmatpush1.bf16.msra.mxu0 0
    %284 = vmatprep.subr.bf16.mxu0 0
    %285 = vmatpush1.bf16.msra.mxu0 0
    %286 = vmatprep.mubr.bf16.mxu0 0
    %287 = vmatmul.mubr.bf16.gmra.mrb[0].mxu0 %v182
    %v288 = vpop.f32.mrb[0].mxu0
    %v289 = vadd.f32 %v204, %v288
    %v290 = vpop.f32.mrb[0].mxu0
    %v291 = vpop.f32.mrb[0].mxu0
    %v292 = vpop.f32.mrb[0].mxu0
    %293 = vdwg.mxu0
    %v294 = vmax.f32 %v289, 0.0
    %v295 = vpack.c.bf16 %v294, %v294
    %v296 = vld [vmem:[#allocation7] sm:$0xf]
    %v297 = vld [vmem:[#allocation7 + $0x4] sm:$0xf]
    %v298 = vld [vmem:[#allocation7 + $0x8] sm:$0xf]
    %v299 = vld [vmem:[#allocation7 + $0xc] sm:$0xf]
    %v300 = vld [vmem:[#allocation7 + $0x10] sm:$0xf]
    %v301 = vld [vmem:[#allocation7 + $0x14] sm:$0xf]
    %v302 = vld [vmem:[#allocation7 + $0x18] sm:$0xf]
    %v303 = vld [vmem:[#allocation7 + $0x1c] sm:$0xf]
    %v304 = vld [vmem:[#allocation7 + $0x20] sm:$0xf]
    %v305 = vld [vmem:[#allocation7 + $0x24] sm:$0xf]
    %v306 = vld [vmem:[#allocation7 + $0x28] sm:$0xf]
    %v307 = vld [vmem:[#allocation7 + $0x2c] sm:$0xf]
    %v308 = vld [vmem:[#allocation7 + $0x30] sm:$0xf]
    %v309 = vld [vmem:[#allocation7 + $0x34] sm:$0xf]
    %v310 = vld [vmem:[#allocation7 + $0x38] sm:$0xf]
    %v311 = vld [vmem:[#allocation7 + $0x3c] sm:$0xf]
    %v312 = vld [vmem:[%s6] sm:$0x1]
    %v314 = vlaneseq
    %v315 = vshrl.u32 %v314, 7
    %v316 = vsub.s32 0, %v315
    %v317 = vrot.slane %v312, %v316
    %v335 = vunpack.c.l.b16 %v296
    %v336 = vunpack.c.l.b16 %v297
    %v337 = vunpack.c.l.b16 %v298
    %v338 = vunpack.c.l.b16 %v299
    %v339 = vunpack.c.l.b16 %v300
    %v340 = vunpack.c.l.b16 %v301
    %v341 = vunpack.c.l.b16 %v302
    %v342 = vunpack.c.l.b16 %v303
    %v343 = vunpack.c.l.b16 %v304
    %v344 = vunpack.c.l.b16 %v305
    %v345 = vunpack.c.l.b16 %v306
    %v346 = vunpack.c.l.b16 %v307
    %v347 = vunpack.c.l.b16 %v308
    %v348 = vunpack.c.l.b16 %v309
    %v349 = vunpack.c.l.b16 %v310
    %v350 = vunpack.c.l.b16 %v311
    %v351 = vpack.c.b16 %v336, %v335
    %v352 = vpack.c.b16 %v338, %v337
    %v353 = vpack.c.b16 %v340, %v339
    %v354 = vpack.c.b16 %v342, %v341
    %v355 = vpack.c.b16 %v344, %v343
    %v356 = vpack.c.b16 %v346, %v345
    %v357 = vpack.c.b16 %v348, %v347
    %v358 = vpack.c.b16 %v350, %v349
    %367 = vmatprep.subr.bf16.mxu0 0
    %368 = vmatpush1.bf16.msra.mxu0 %v351
    %369 = vmatprep.subr.bf16.mxu0 0
    %370 = vmatpush1.bf16.msra.mxu0 %v352
    %371 = vmatprep.subr.bf16.mxu0 0
    %372 = vmatpush1.bf16.msra.mxu0 %v353
    %373 = vmatprep.subr.bf16.mxu0 0
    %374 = vmatpush1.bf16.msra.mxu0 %v354
    %375 = vmatprep.subr.bf16.mxu0 0
    %376 = vmatpush1.bf16.msra.mxu0 %v355
    %377 = vmatprep.subr.bf16.mxu0 0
    %378 = vmatpush1.bf16.msra.mxu0 %v356
    %379 = vmatprep.subr.bf16.mxu0 0
    %380 = vmatpush1.bf16.msra.mxu0 %v357
    %381 = vmatprep.subr.bf16.mxu0 0
    %382 = vmatpush1.bf16.msra.mxu0 %v358
    %383 = vmatprep.subr.bf16.mxu0 0
    %384 = vmatpush1.bf16.msra.mxu0 0
    %385 = vmatprep.subr.bf16.mxu0 0
    %386 = vmatpush1.bf16.msra.mxu0 0
    %387 = vmatprep.subr.bf16.mxu0 0
    %388 = vmatpush1.bf16.msra.mxu0 0
    %389 = vmatprep.subr.bf16.mxu0 0
    %390 = vmatpush1.bf16.msra.mxu0 0
    %391 = vmatprep.subr.bf16.mxu0 0
    %392 = vmatpush1.bf16.msra.mxu0 0
    %393 = vmatprep.subr.bf16.mxu0 0
    %394 = vmatpush1.bf16.msra.mxu0 0
    %395 = vmatprep.subr.bf16.mxu0 0
    %396 = vmatpush1.bf16.msra.mxu0 0
    %397 = vmatprep.subr.bf16.mxu0 0
    %398 = vmatpush1.bf16.msra.mxu0 0
    %399 = vmatprep.mubr.bf16.mxu0 0
    %400 = vmatmul.mubr.bf16.gmra.mrb[0].mxu0 %v295
    %v401 = vpop.f32.mrb[0].mxu0
    %v402 = vadd.f32 %v317, %v401
    %v403 = vpop.f32.mrb[0].mxu0
    %v404 = vpop.f32.mrb[0].mxu0
    %v405 = vpop.f32.mrb[0].mxu0
    %406 = vdwg.mxu0
    %407 = vst [vmem:[#allocation8] sm:$0xff] %v402
    // Predicated region
    $region42: #{_lambda_.1} parent=1 // pred_check
      _
    $region43: #{_lambda_.1} parent=1 // pred_check_branch
      %409 = sbr.rel (0) target = $region45
    $region44: #{_lambda_.1} parent=1 // pred_region
      %s411 = ssub.s32 128, 128
      %412 = vsyncadd [#allocation4], %s411
      %s414 = sshll.u32 [#allocation8], 4
      %s415 = int_to_ptr.vmem [resolvable:$true] %s414
      %417 = dma.vmem_to_hbm [thread:$0]  %s415, 128, %s7, [#allocation4]
    $region45: #{_lambda_.1} parent=1 // pred_fallthru
      _
    // Predicated region
    $region46: #{_lambda_.1} parent=1 // pred_check
      _
    $region47: #{_lambda_.1} parent=1 // pred_check_branch
      %419 = sbr.rel (0) target = $region49
    $region48: #{_lambda_.1} parent=1 // pred_region
      %420 = dma.done [#allocation4], 128
    $region49: #{_lambda_.1} parent=1 // pred_fallthru
      _
    %421 = vsyncpa [#allocation3], 1
    %422 = vsyncpa [#allocation6], 1
    %423 = vsyncpa [#allocation4], 1

</llo_original>
